<compile_context>
chip_gen: v7x
topology: tpu7x:2x2x1
jax: 0.10.0
libtpu: 0.0.40
codegen_flags: <defaults>
</compile_context>

<pallas_src>
import functools

import jax
import jax.numpy as jnp
from jax.experimental import pallas as pl
from jax.experimental.pallas import tpu as pltpu

_LANE = 128
_ROW_ALIGN = 16   # sublane-block alignment valid for both f32 (8) and bf16 (16) preds


def _cdiv(a, b):
    return (a + b - 1) // b


def _round_up(x, m):
    return _cdiv(x, m) * m


def _combo_stats_kernel(preds_ref, labels_ref, stats_ref, *,
                        num_classes, label_map, need_mask, out_rows):
    """One (batch, spatial-tile) grid step.

    preds_ref : (1, C, TR, 128)  float block (logits)
    labels_ref: (1, TR, 128)     int32 block (raw intensities; -1 marks padding)
    stats_ref : (1, 1, S, 128)   float32 block, S = round_up(3*C + 1, 8)
        rows [0, C)     : per-channel intersection lane-partials
        rows [C, 2C)    : per-channel sum(p) lane-partials
        rows [2C, 3C)   : per-channel sum(onehot) lane-partials
        row  3C         : cross-entropy lane-partials
        remaining rows  : zeros
    """
    C = num_classes

    # --- label remap (convert_labels) ----------------------------------------
    raw = labels_ref[0]                                    # (TR, 128) int32
    lab = jnp.zeros_like(raw)
    for value, cls in label_map:
        lab = jnp.where(raw == value, jnp.int32(cls), lab)
    if any(cls >= C for _, cls in label_map):              # torch.clamp(max=C-1)
        lab = jnp.minimum(lab, C - 1)

    if need_mask:
        # Sentinel-padded labels (-1) -> 1 compare/pixel instead of iota math.
        valid = (raw >= 0).astype(jnp.float32)

    # --- softmax over channels on per-channel (TR,128) slabs ------------------
    m = preds_ref[0, 0].astype(jnp.float32)
    for c in range(1, C):
        m = jnp.maximum(m, preds_ref[0, c].astype(jnp.float32))

    es = []
    se = None
    for c in range(C):
        e = jnp.exp(preds_ref[0, c].astype(jnp.float32) - m)
        es.append(e)
        se = e if se is None else se + e
    inv_se = pl.reciprocal(se, approx=False)   # exact: keeps 1e-4/1e-5 tolerance
    log_se = jnp.log(se)
    if need_mask:
        inv_se = inv_se * valid                 # pre-masked probabilities

    # --- per-channel lane-partials: sublane-only reductions -------------------
    x_true = jnp.zeros_like(m)
    inter_rows, pred_rows, gt_rows = [], [], []
    for c in range(C):
        eq = lab == c
        x_true = jnp.where(eq, preds_ref[0, c].astype(jnp.float32), x_true)
        if need_mask:
            onehot = jnp.where(eq, valid, 0.0)
        else:
            onehot = eq.astype(jnp.float32)
        p = es[c] * inv_se                                 # masked if need_mask
        inter_rows.append(jnp.sum(p * onehot, axis=0, keepdims=True))  # (1,128)
        pred_rows.append(jnp.sum(p, axis=0, keepdims=True))
        gt_rows.append(jnp.sum(onehot, axis=0, keepdims=True))

    # Fused cross-entropy: -log p_true = log(se) + m - x_true  (one reduction).
    ce_pp = log_se + m - x_true
    if need_mask:
        ce_pp = ce_pp * valid
    ce_row = jnp.sum(ce_pp, axis=0, keepdims=True)

    rows = inter_rows + pred_rows + gt_rows + [ce_row]
    pad = out_rows - len(rows)
    if pad:
        rows.append(jnp.zeros((pad, _LANE), jnp.float32))
    stats_ref[0, 0] = jnp.concatenate(rows, axis=0)        # lane-dense block store


def combo_loss(preds, labels, dataset_name="ACDC", alpha=0.5, smooth=1e-5):
    """preds: (B, C, H, W) float (f32 or bf16); labels: (B, 1, H, W) raw intensities."""
    B, C, H, W = preds.shape
    HW = H * W

    if dataset_name == "ACDC":
        label_map = ((85, 1), (170, 2), (255, 3))
    elif dataset_name == "COVID19":
        label_map = ((255, 1),)
    else:
        raise ValueError(f"Unsupported dataset name: {dataset_name}")

    # ---- generation-aware VMEM / block budget --------------------------------
    try:
        info = pltpu.get_tpu_info()
        vmem_cap = int(getattr(info, "vmem_capacity_bytes", 64 << 20))
    except Exception:  # be robust if hw query is unavailable at trace time
        vmem_cap = 64 << 20
    block_budget = (8 << 20) if vmem_cap >= (96 << 20) else (4 << 20)

    pred_isz = jnp.dtype(preds.dtype).itemsize
    bytes_per_row = _LANE * (C * pred_isz + 4)             # preds + int32 labels
    max_rows = max(_ROW_ALIGN,
                   (block_budget // bytes_per_row) // _ROW_ALIGN * _ROW_ALIGN)

    # ---- balanced spatial tiling (no last-tile waste, no hidden pad copy) ----
    n_rows = _cdiv(HW, _LANE)
    n_tiles = 1 if n_rows <= max_rows else _cdiv(n_rows, max_rows)
    if B * n_tiles < 2 and n_rows >= 2 * _ROW_ALIGN:       # keep 2 TCs busy (v7x)
        n_tiles = max(n_tiles, 2)
    tile_rows = n_rows if n_tiles == 1 else _round_up(_cdiv(n_rows, n_tiles),
                                                      _ROW_ALIGN)
    padded_rows = n_tiles * tile_rows
    hw_pad = padded_rows * _LANE
    need_mask = hw_pad != HW

    preds_r = preds.reshape(B, C, HW)
    labels_r = labels.reshape(B, HW).astype(jnp.int32)
    if need_mask:
        preds_r = jnp.pad(preds_r, ((0, 0), (0, 0), (0, hw_pad - HW)))
        labels_r = jnp.pad(labels_r, ((0, 0), (0, hw_pad - HW)),
                           constant_values=-1)             # sentinel -> cheap mask
    preds_r = preds_r.reshape(B, C, padded_rows, _LANE)
    labels_r = labels_r.reshape(B, padded_rows, _LANE)

    out_rows = _round_up(3 * C + 1, 8)                     # lane-dense stats rows

    kernel = functools.partial(
        _combo_stats_kernel, num_classes=C, label_map=label_map,
        need_mask=need_mask, out_rows=out_rows)

    # Honest VMEM accounting: 2 inputs x 2 buffers x block + live temps + margin.
    block_bytes = tile_rows * bytes_per_row
    temps_bytes = (C + 6) * tile_rows * _LANE * 4
    out_bytes = 2 * out_rows * _LANE * 4
    vmem_limit = 4 * block_bytes + temps_bytes + out_bytes + (4 << 20)
    vmem_limit = int(min(max(vmem_limit, 16 << 20), (vmem_cap * 3) // 4))

    stats = pl.pallas_call(
        kernel,
        out_shape=jax.ShapeDtypeStruct((B, n_tiles, out_rows, _LANE), jnp.float32),
        grid=(B, n_tiles),
        in_specs=[
            pl.BlockSpec((1, C, tile_rows, _LANE), lambda b, t: (b, 0, t, 0)),
            pl.BlockSpec((1, tile_rows, _LANE), lambda b, t: (b, t, 0)),
        ],
        out_specs=pl.BlockSpec((1, 1, out_rows, _LANE), lambda b, t: (b, t, 0, 0)),
        compiler_params=pltpu.CompilerParams(
            dimension_semantics=("parallel", "parallel"),
            vmem_limit_bytes=vmem_limit,
        ),
    )(preds_r, labels_r)

    # ---- tiny O(B * n_tiles * S) glue: lane/tile reduce + final formula ------
    per_b = jnp.sum(stats, axis=(1, 3))                    # (B, S)
    inter = per_b[:, 0:C]
    pred_o = per_b[:, C:2 * C]
    ground_o = per_b[:, 2 * C:3 * C]
    ce_sum = jnp.sum(per_b[:, 3 * C])
    dice = jnp.mean(1.0 - (2.0 * inter + smooth) / (pred_o + ground_o + smooth))
    ce = ce_sum / (B * HW)
    return alpha * dice + (1.0 - alpha) * ce


def combo_loss_ref(preds, labels, dataset_name="ACDC", alpha=0.5, smooth=1e-5):
    """Pure-JAX reference for correctness checking."""
    B, C, H, W = preds.shape
    if dataset_name == "ACDC":
        label_map = ((85, 1), (170, 2), (255, 3))
    elif dataset_name == "COVID19":
        label_map = ((255, 1),)
    else:
        raise ValueError(dataset_name)

    lab = jnp.zeros_like(labels)
    for value, cls in label_map:
        lab = jnp.where(labels == value, cls, lab)
    lab = jnp.clip(lab, 0, C - 1)[:, 0]                    # (B, H, W)

    logp = jax.nn.log_softmax(preds.astype(jnp.float32), axis=1)
    p = jnp.exp(logp)
    onehot = jax.nn.one_hot(lab, C, axis=1, dtype=jnp.float32)   # (B, C, H, W)

    ce = -jnp.mean(jnp.sum(onehot * logp, axis=1))
    inter = jnp.sum(p * onehot, axis=(2, 3))
    pred_o = jnp.sum(p, axis=(2, 3))
    ground_o = jnp.sum(onehot, axis=(2, 3))
    dice = jnp.mean(1.0 - (2.0 * inter + smooth) / (pred_o + ground_o + smooth))
    return alpha * dice + (1.0 - alpha) * ce


if __name__ == "__main__":
    key = jax.random.PRNGKey(0)
    kp, kl, kp2, kl2 = jax.random.split(key, 4)

    # Case 1: lane-aligned spatial size (mask-free fast path).
    B, C, H, W = 2, 4, 16, 16
    preds = jax.random.normal(kp, (B, C, H, W), dtype=jnp.float32)
    idx = jax.random.randint(kl, (B, 1, H, W), 0, 4)
    labels = jnp.array([0, 85, 170, 255], dtype=jnp.int32)[idx]  # raw intensities
    out = jax.block_until_ready(combo_loss(preds, labels, "ACDC", 0.5, 1e-5))
    ref = combo_loss_ref(preds, labels, "ACDC", 0.5, 1e-5)
    assert jnp.allclose(out, ref, rtol=1e-4, atol=1e-5), (float(out), float(ref))

    # Case 2: non-aligned spatial size (exercises the sentinel-masked remainder).
    B2, C2, H2, W2 = 1, 4, 10, 10
    preds2 = jax.random.normal(kp2, (B2, C2, H2, W2), dtype=jnp.float32)
    idx2 = jax.random.randint(kl2, (B2, 1, H2, W2), 0, 4)
    labels2 = jnp.array([0, 85, 170, 255], dtype=jnp.int32)[idx2]
    out2 = jax.block_until_ready(combo_loss(preds2, labels2, "ACDC", 0.5, 1e-5))
    ref2 = combo_loss_ref(preds2, labels2, "ACDC", 0.5, 1e-5)
    assert jnp.allclose(out2, ref2, rtol=1e-4, atol=1e-5), (float(out2), float(ref2))

    print("KERNEL_OK")
</pallas_src>

<mosaic_0001>
module attributes {stable_mosaic.version = 11 : i64} {
  func.func @_combo_stats_kernel(%arg0: i32, %arg1: i32, %arg2: memref<1x4x2x128xf32, #tpu.memory_space<vmem>>, %arg3: memref<1x2x128xi32, #tpu.memory_space<vmem>>, %arg4: memref<1x1x16x128xf32, #tpu.memory_space<vmem>>) attributes {dimension_semantics = [#tpu.dimension_semantics<parallel>, #tpu.dimension_semantics<parallel>], iteration_bounds = array<i64: 2, 1>, scalar_prefetch = 0 : i64, scratch_operands = 0 : i64, tpu.core_type = #tpu.core_type<tc>, window_params = [{transform_indices = @transform_0, window_bounds = array<i64: 1, 4, 2, 128>}, {transform_indices = @transform_1, window_bounds = array<i64: 1, 2, 128>}, {transform_indices = @transform_2, window_bounds = array<i64: 1, 1, 16, 128>}]} {
    %c0 = arith.constant 0 : index
    %c0_0 = arith.constant 0 : index
    %c0_1 = arith.constant 0 : index
    %0 = vector.load %arg3[%c0, %c0_0, %c0_1] : memref<1x2x128xi32, #tpu.memory_space<vmem>>, vector<1x2x128xi32>
    %1 = vector.shape_cast %0 : vector<1x2x128xi32> to vector<2x128xi32>
    %c0_i32 = arith.constant 0 : i32
    %2 = vector.broadcast %c0_i32 : i32 to vector<2x128xi32>
    %c85_i32 = arith.constant 85 : i32
    %3 = vector.broadcast %c85_i32 : i32 to vector<2x128xi32>
    %4 = arith.cmpi eq, %1, %3 : vector<2x128xi32>
    %c1_i32 = arith.constant 1 : i32
    %5 = vector.broadcast %c1_i32 : i32 to vector<2x128xi32>
    %6 = arith.select %4, %5, %2 : vector<2x128xi1>, vector<2x128xi32>
    %c170_i32 = arith.constant 170 : i32
    %7 = vector.broadcast %c170_i32 : i32 to vector<2x128xi32>
    %8 = arith.cmpi eq, %1, %7 : vector<2x128xi32>
    %c2_i32 = arith.constant 2 : i32
    %9 = vector.broadcast %c2_i32 : i32 to vector<2x128xi32>
    %10 = arith.select %8, %9, %6 : vector<2x128xi1>, vector<2x128xi32>
    %c255_i32 = arith.constant 255 : i32
    %11 = vector.broadcast %c255_i32 : i32 to vector<2x128xi32>
    %12 = arith.cmpi eq, %1, %11 : vector<2x128xi32>
    %c3_i32 = arith.constant 3 : i32
    %13 = vector.broadcast %c3_i32 : i32 to vector<2x128xi32>
    %14 = arith.select %12, %13, %10 : vector<2x128xi1>, vector<2x128xi32>
    %c0_2 = arith.constant 0 : index
    %c0_3 = arith.constant 0 : index
    %c0_4 = arith.constant 0 : index
    %c0_5 = arith.constant 0 : index
    %15 = vector.load %arg2[%c0_2, %c0_3, %c0_4, %c0_5] : memref<1x4x2x128xf32, #tpu.memory_space<vmem>>, vector<1x1x2x128xf32>
    %16 = vector.shape_cast %15 : vector<1x1x2x128xf32> to vector<2x128xf32>
    %c0_6 = arith.constant 0 : index
    %c1 = arith.constant 1 : index
    %c0_7 = arith.constant 0 : index
    %c0_8 = arith.constant 0 : index
    %17 = vector.load %arg2[%c0_6, %c1, %c0_7, %c0_8] : memref<1x4x2x128xf32, #tpu.memory_space<vmem>>, vector<1x1x2x128xf32>
    %18 = vector.shape_cast %17 : vector<1x1x2x128xf32> to vector<2x128xf32>
    %19 = arith.maximumf %16, %18 : vector<2x128xf32>
    %c0_9 = arith.constant 0 : index
    %c2 = arith.constant 2 : index
    %c0_10 = arith.constant 0 : index
    %c0_11 = arith.constant 0 : index
    %20 = vector.load %arg2[%c0_9, %c2, %c0_10, %c0_11] : memref<1x4x2x128xf32, #tpu.memory_space<vmem>>, vector<1x1x2x128xf32>
    %21 = vector.shape_cast %20 : vector<1x1x2x128xf32> to vector<2x128xf32>
    %22 = arith.maximumf %19, %21 : vector<2x128xf32>
    %c0_12 = arith.constant 0 : index
    %c3 = arith.constant 3 : index
    %c0_13 = arith.constant 0 : index
    %c0_14 = arith.constant 0 : index
    %23 = vector.load %arg2[%c0_12, %c3, %c0_13, %c0_14] : memref<1x4x2x128xf32, #tpu.memory_space<vmem>>, vector<1x1x2x128xf32>
    %24 = vector.shape_cast %23 : vector<1x1x2x128xf32> to vector<2x128xf32>
    %25 = arith.maximumf %22, %24 : vector<2x128xf32>
    %c0_15 = arith.constant 0 : index
    %c0_16 = arith.constant 0 : index
    %c0_17 = arith.constant 0 : index
    %c0_18 = arith.constant 0 : index
    %26 = vector.load %arg2[%c0_15, %c0_16, %c0_17, %c0_18] : memref<1x4x2x128xf32, #tpu.memory_space<vmem>>, vector<1x1x2x128xf32>
    %27 = vector.shape_cast %26 : vector<1x1x2x128xf32> to vector<2x128xf32>
    %28 = arith.subf %27, %25 : vector<2x128xf32>
    %29 = math.exp %28 : vector<2x128xf32>
    %c0_19 = arith.constant 0 : index
    %c1_20 = arith.constant 1 : index
    %c0_21 = arith.constant 0 : index
    %c0_22 = arith.constant 0 : index
    %30 = vector.load %arg2[%c0_19, %c1_20, %c0_21, %c0_22] : memref<1x4x2x128xf32, #tpu.memory_space<vmem>>, vector<1x1x2x128xf32>
    %31 = vector.shape_cast %30 : vector<1x1x2x128xf32> to vector<2x128xf32>
    %32 = arith.subf %31, %25 : vector<2x128xf32>
    %33 = math.exp %32 : vector<2x128xf32>
    %34 = arith.addf %29, %33 : vector<2x128xf32>
    %c0_23 = arith.constant 0 : index
    %c2_24 = arith.constant 2 : index
    %c0_25 = arith.constant 0 : index
    %c0_26 = arith.constant 0 : index
    %35 = vector.load %arg2[%c0_23, %c2_24, %c0_25, %c0_26] : memref<1x4x2x128xf32, #tpu.memory_space<vmem>>, vector<1x1x2x128xf32>
    %36 = vector.shape_cast %35 : vector<1x1x2x128xf32> to vector<2x128xf32>
    %37 = arith.subf %36, %25 : vector<2x128xf32>
    %38 = math.exp %37 : vector<2x128xf32>
    %39 = arith.addf %34, %38 : vector<2x128xf32>
    %c0_27 = arith.constant 0 : index
    %c3_28 = arith.constant 3 : index
    %c0_29 = arith.constant 0 : index
    %c0_30 = arith.constant 0 : index
    %40 = vector.load %arg2[%c0_27, %c3_28, %c0_29, %c0_30] : memref<1x4x2x128xf32, #tpu.memory_space<vmem>>, vector<1x1x2x128xf32>
    %41 = vector.shape_cast %40 : vector<1x1x2x128xf32> to vector<2x128xf32>
    %42 = arith.subf %41, %25 : vector<2x128xf32>
    %43 = math.exp %42 : vector<2x128xf32>
    %44 = arith.addf %39, %43 : vector<2x128xf32>
    %45 = tpu.reciprocal %44 : vector<2x128xf32> -> vector<2x128xf32>
    %46 = math.log %44 : vector<2x128xf32>
    %cst = arith.constant 0.000000e+00 : f32
    %47 = vector.broadcast %cst : f32 to vector<2x128xf32>
    %c0_i32_31 = arith.constant 0 : i32
    %48 = vector.broadcast %c0_i32_31 : i32 to vector<2x128xi32>
    %49 = arith.cmpi eq, %14, %48 : vector<2x128xi32>
    %c0_32 = arith.constant 0 : index
    %c0_33 = arith.constant 0 : index
    %c0_34 = arith.constant 0 : index
    %c0_35 = arith.constant 0 : index
    %50 = vector.load %arg2[%c0_32, %c0_33, %c0_34, %c0_35] : memref<1x4x2x128xf32, #tpu.memory_space<vmem>>, vector<1x1x2x128xf32>
    %51 = vector.shape_cast %50 : vector<1x1x2x128xf32> to vector<2x128xf32>
    %52 = arith.select %49, %51, %47 : vector<2x128xi1>, vector<2x128xf32>
    %53 = arith.extui %49 : vector<2x128xi1> to vector<2x128xi32>
    %54 = arith.sitofp %53 : vector<2x128xi32> to vector<2x128xf32>
    %55 = arith.mulf %29, %45 : vector<2x128xf32>
    %56 = arith.mulf %55, %54 : vector<2x128xf32>
    %cst_36 = arith.constant dense<0.000000e+00> : vector<128xf32>
    %57 = vector.multi_reduction <add>, %56, %cst_36 [0] : vector<2x128xf32> to vector<128xf32>
    %58 = vector.shape_cast %57 : vector<128xf32> to vector<1x128xf32>
    %cst_37 = arith.constant dense<0.000000e+00> : vector<128xf32>
    %59 = vector.multi_reduction <add>, %55, %cst_37 [0] : vector<2x128xf32> to vector<128xf32>
    %60 = vector.shape_cast %59 : vector<128xf32> to vector<1x128xf32>
    %cst_38 = arith.constant dense<0.000000e+00> : vector<128xf32>
    %61 = vector.multi_reduction <add>, %54, %cst_38 [0] : vector<2x128xf32> to vector<128xf32>
    %62 = vector.shape_cast %61 : vector<128xf32> to vector<1x128xf32>
    %c1_i32_39 = arith.constant 1 : i32
    %63 = vector.broadcast %c1_i32_39 : i32 to vector<2x128xi32>
    %64 = arith.cmpi eq, %14, %63 : vector<2x128xi32>
    %c0_40 = arith.constant 0 : index
    %c1_41 = arith.constant 1 : index
    %c0_42 = arith.constant 0 : index
    %c0_43 = arith.constant 0 : index
    %65 = vector.load %arg2[%c0_40, %c1_41, %c0_42, %c0_43] : memref<1x4x2x128xf32, #tpu.memory_space<vmem>>, vector<1x1x2x128xf32>
    %66 = vector.shape_cast %65 : vector<1x1x2x128xf32> to vector<2x128xf32>
    %67 = arith.select %64, %66, %52 : vector<2x128xi1>, vector<2x128xf32>
    %68 = arith.extui %64 : vector<2x128xi1> to vector<2x128xi32>
    %69 = arith.sitofp %68 : vector<2x128xi32> to vector<2x128xf32>
    %70 = arith.mulf %33, %45 : vector<2x128xf32>
    %71 = arith.mulf %70, %69 : vector<2x128xf32>
    %cst_44 = arith.constant dense<0.000000e+00> : vector<128xf32>
    %72 = vector.multi_reduction <add>, %71, %cst_44 [0] : vector<2x128xf32> to vector<128xf32>
    %73 = vector.shape_cast %72 : vector<128xf32> to vector<1x128xf32>
    %cst_45 = arith.constant dense<0.000000e+00> : vector<128xf32>
    %74 = vector.multi_reduction <add>, %70, %cst_45 [0] : vector<2x128xf32> to vector<128xf32>
    %75 = vector.shape_cast %74 : vector<128xf32> to vector<1x128xf32>
    %cst_46 = arith.constant dense<0.000000e+00> : vector<128xf32>
    %76 = vector.multi_reduction <add>, %69, %cst_46 [0] : vector<2x128xf32> to vector<128xf32>
    %77 = vector.shape_cast %76 : vector<128xf32> to vector<1x128xf32>
    %c2_i32_47 = arith.constant 2 : i32
    %78 = vector.broadcast %c2_i32_47 : i32 to vector<2x128xi32>
    %79 = arith.cmpi eq, %14, %78 : vector<2x128xi32>
    %c0_48 = arith.constant 0 : index
    %c2_49 = arith.constant 2 : index
    %c0_50 = arith.constant 0 : index
    %c0_51 = arith.constant 0 : index
    %80 = vector.load %arg2[%c0_48, %c2_49, %c0_50, %c0_51] : memref<1x4x2x128xf32, #tpu.memory_space<vmem>>, vector<1x1x2x128xf32>
    %81 = vector.shape_cast %80 : vector<1x1x2x128xf32> to vector<2x128xf32>
    %82 = arith.select %79, %81, %67 : vector<2x128xi1>, vector<2x128xf32>
    %83 = arith.extui %79 : vector<2x128xi1> to vector<2x128xi32>
    %84 = arith.sitofp %83 : vector<2x128xi32> to vector<2x128xf32>
    %85 = arith.mulf %38, %45 : vector<2x128xf32>
    %86 = arith.mulf %85, %84 : vector<2x128xf32>
    %cst_52 = arith.constant dense<0.000000e+00> : vector<128xf32>
    %87 = vector.multi_reduction <add>, %86, %cst_52 [0] : vector<2x128xf32> to vector<128xf32>
    %88 = vector.shape_cast %87 : vector<128xf32> to vector<1x128xf32>
    %cst_53 = arith.constant dense<0.000000e+00> : vector<128xf32>
    %89 = vector.multi_reduction <add>, %85, %cst_53 [0] : vector<2x128xf32> to vector<128xf32>
    %90 = vector.shape_cast %89 : vector<128xf32> to vector<1x128xf32>
    %cst_54 = arith.constant dense<0.000000e+00> : vector<128xf32>
    %91 = vector.multi_reduction <add>, %84, %cst_54 [0] : vector<2x128xf32> to vector<128xf32>
    %92 = vector.shape_cast %91 : vector<128xf32> to vector<1x128xf32>
    %c3_i32_55 = arith.constant 3 : i32
    %93 = vector.broadcast %c3_i32_55 : i32 to vector<2x128xi32>
    %94 = arith.cmpi eq, %14, %93 : vector<2x128xi32>
    %c0_56 = arith.constant 0 : index
    %c3_57 = arith.constant 3 : index
    %c0_58 = arith.constant 0 : index
    %c0_59 = arith.constant 0 : index
    %95 = vector.load %arg2[%c0_56, %c3_57, %c0_58, %c0_59] : memref<1x4x2x128xf32, #tpu.memory_space<vmem>>, vector<1x1x2x128xf32>
    %96 = vector.shape_cast %95 : vector<1x1x2x128xf32> to vector<2x128xf32>
    %97 = arith.select %94, %96, %82 : vector<2x128xi1>, vector<2x128xf32>
    %98 = arith.extui %94 : vector<2x128xi1> to vector<2x128xi32>
    %99 = arith.sitofp %98 : vector<2x128xi32> to vector<2x128xf32>
    %100 = arith.mulf %43, %45 : vector<2x128xf32>
    %101 = arith.mulf %100, %99 : vector<2x128xf32>
    %cst_60 = arith.constant dense<0.000000e+00> : vector<128xf32>
    %102 = vector.multi_reduction <add>, %101, %cst_60 [0] : vector<2x128xf32> to vector<128xf32>
    %103 = vector.shape_cast %102 : vector<128xf32> to vector<1x128xf32>
    %cst_61 = arith.constant dense<0.000000e+00> : vector<128xf32>
    %104 = vector.multi_reduction <add>, %100, %cst_61 [0] : vector<2x128xf32> to vector<128xf32>
    %105 = vector.shape_cast %104 : vector<128xf32> to vector<1x128xf32>
    %cst_62 = arith.constant dense<0.000000e+00> : vector<128xf32>
    %106 = vector.multi_reduction <add>, %99, %cst_62 [0] : vector<2x128xf32> to vector<128xf32>
    %107 = vector.shape_cast %106 : vector<128xf32> to vector<1x128xf32>
    %108 = arith.addf %46, %25 : vector<2x128xf32>
    %109 = arith.subf %108, %97 : vector<2x128xf32>
    %cst_63 = arith.constant dense<0.000000e+00> : vector<128xf32>
    %110 = vector.multi_reduction <add>, %109, %cst_63 [0] : vector<2x128xf32> to vector<128xf32>
    %111 = vector.shape_cast %110 : vector<128xf32> to vector<1x128xf32>
    %cst_64 = arith.constant 0.000000e+00 : f32
    %112 = vector.broadcast %cst_64 : f32 to vector<3x128xf32>
    %113 = tpu.concatenate %58, %73, %88, %103, %60, %75, %90, %105, %62, %77, %92, %107, %111, %112 in 0 : vector<1x128xf32>, vector<1x128xf32>, vector<1x128xf32>, vector<1x128xf32>, vector<1x128xf32>, vector<1x128xf32>, vector<1x128xf32>, vector<1x128xf32>, vector<1x128xf32>, vector<1x128xf32>, vector<1x128xf32>, vector<1x128xf32>, vector<1x128xf32>, vector<3x128xf32> -> vector<16x128xf32>
    %c0_65 = arith.constant 0 : index
    %c0_66 = arith.constant 0 : index
    %c0_67 = arith.constant 0 : index
    %c0_68 = arith.constant 0 : index
    %114 = vector.load %arg4[%c0_65, %c0_66, %c0_67, %c0_68] : memref<1x1x16x128xf32, #tpu.memory_space<vmem>>, vector<1x1x16x128xf32>
    %115 = vector.shape_cast %114 : vector<1x1x16x128xf32> to vector<16x128xf32>
    %116 = vector.shape_cast %113 : vector<16x128xf32> to vector<1x1x16x128xf32>
    tpu.vector_store %arg4[%c0_65, %c0_66, %c0_67, %c0_68], %116 {strides = array<i32>} : memref<1x1x16x128xf32, #tpu.memory_space<vmem>>, vector<1x1x16x128xf32>,
    return
  }
  func.func @transform_0(%arg0: i32, %arg1: i32) -> (i32, i32, i32, i32) {
    %c0_i32 = arith.constant 0 : i32
    %c0_i32_0 = arith.constant 0 : i32
    %c0_i32_1 = arith.constant 0 : i32
    return %arg0, %c0_i32, %arg1, %c0_i32_0 : i32, i32, i32, i32
  }
  func.func @transform_1(%arg0: i32, %arg1: i32) -> (i32, i32, i32) {
    %c0_i32 = arith.constant 0 : i32
    %c0_i32_0 = arith.constant 0 : i32
    return %arg0, %arg1, %c0_i32 : i32, i32, i32
  }
  func.func @transform_2(%arg0: i32, %arg1: i32) -> (i32, i32, i32, i32) {
    %c0_i32 = arith.constant 0 : i32
    %c0_i32_0 = arith.constant 0 : i32
    %c0_i32_1 = arith.constant 0 : i32
    return %arg0, %arg1, %c0_i32, %c0_i32_0 : i32, i32, i32, i32
  }
}

</mosaic_0001>

<llo_original>
// kernel: tpu_custom_call.1
$region0: #{tpu_custom_call.1}
  #allocation0 [shape = 'u32[]', space=smem, size = 0x4, offset = 0x4, fixed_abs, tag = 'smem constant byte address 0x4 - core index']
  #allocation1 [shape = 'u32[144,128]{1,0:T(1,128)}', space=vmem, size = 0x12000, scoped, tag = 'internal scratch']
  %s0 = inlined_call_operand.hbm [shape: f32[2,4,2,128], index: 0, kind: input, shape index: {}]
  %s1 = inlined_call_operand.hbm [shape: s32[2,2,128], index: 1, kind: input, shape index: {}]
  %s2 = inlined_call_operand.hbm [shape: f32[2,1,16,128], index: 2, kind: output, shape index: {}]
  %s3 = sld [smem:[#allocation0]]
  $region49: #{tpu_custom_call.1} parent=0
    _
  %s5 = ssub.s32 1, %s3
  %s6 = scalar_select 0, %s5, %s3
  $region1: #{tpu_custom_call.1} parent=0
    #allocation2 [shape = 'u8[8192]{0}', space=vmem, size = 0x2000, scoped, tag = 'input window, operand 0']
    #allocation3 [shape = 's32[2]{0}', space=sflag, size = 0x8, scoped, tag = 'scoped memory for tpu_custom_call.1']
    #allocation4 [shape = 's32[2]{0}', space=sflag, size = 0x8, scoped, tag = 'scoped memory for tpu_custom_call.1']
    #allocation5 [shape = 'u8[2048]{0}', space=vmem, size = 0x800, scoped, tag = 'input window, operand 1']
    #allocation6 [shape = 's32[2]{0}', space=sflag, size = 0x8, scoped, tag = 'scoped memory for tpu_custom_call.1']
    #allocation7 [shape = 'u8[16384]{0}', space=vmem, size = 0x4000, scoped, tag = 'output window, operand 0']
    %7 = vsyncpa [#allocation3], 0
    %s8 = scalar_lea.sflag [#allocation3], 1
    %9 = vsyncpa %s8, 0
    %10 = vsyncpa [#allocation6], 0
    %s11 = scalar_lea.sflag [#allocation6], 1
    %12 = vsyncpa %s11, 0
    %13 = vsyncpa [#allocation4], 0
    %s14 = scalar_lea.sflag [#allocation4], 1
    %15 = vsyncpa %s14, 0
    loop: start=0, step=1, limit=4
    $region2: #{tpu_custom_call.1} parent=1 // loop_pre_header
      _
    $region3: #{tpu_custom_call.1} parent=1 // loop_header
      %s17 = sphi 0, %s21
      %p18 = scmp.ge.s32.totalorder %s17, 4
      %s24 = sphi 0, %s36
      %s25 = sphi 0, %s32
      %s26 = sphi 0, %s24
      %s27 = sphi 0, %s25
      %s28 = sphi 0, %s26
      %s29 = sphi 0, %s27
      %s41 = sphi 0, %s43
      %s44 = sphi 0, %s41
      %s45 = sphi 0, %s44
      %s61 = sphi 0, %s45
      %s69 = sphi 0, %s71
      %s72 = sphi 0, %s69
      %s73 = sphi 0, %s72
      %s89 = sphi 0, %s73
      %s97 = sphi 0, %s99
      %s100 = sphi 0, %s97
      %s101 = sphi 0, %s100
      %s117 = sphi 0, %s101
    $region4: #{tpu_custom_call.1} parent=1 // loop_header_branch
      %20 = sbr.rel (%p18) target = $region8
    $region5: #{tpu_custom_call.1} parent=1 // loop_body
      %s22 = ssub.s32 %s17, 1
      %s23 = ssub.s32 %s17, 2
      %s30 = sadd.s32 1, %s25
      %p31 = scmp.ge.s32.totalorder %s30, 1
      %s32 = scalar_select %p31, 0, %s30
      %s33 = sadd.s32 1, %s24
      %s34 = scalar_select %p31, %s33, %s24
      %p35 = scmp.ge.s32.totalorder %s34, 2
      %s36 = scalar_select %p35, 0, %s34
      %s37 = ssub.s32 %s24, %s36
      %s38 = ssub.s32 %s25, %s32
      %s39 = sor.u32 %s37, %s38
      %p40 = scmp.eq.s32.totalorder %s39, 0
      %s42 = sadd.s32 %s41, 1
      %s43 = scalar_select %p40, %s41, %s42
      %p46 = pneg %p40
      %p47 = scmp.eq.s32.totalorder %s17, 1
      %p48 = por %p46, %p47
      %p49 = scmp.ne.s32.totalorder %s41, %s44
      %p50 = scmp.eq.s32.totalorder %s17, 0
      %p51 = por %p49, %p50
      %p52 = scmp.ne.s32.totalorder %s41, %s44
      %p53 = scmp.eq.s32.totalorder %s22, 1
      %p54 = por %p52, %p53
      %p55 = scmp.ne.s32.totalorder %s44, %s45
      %p56 = scmp.eq.s32.totalorder %s22, 0
      %p57 = por %p55, %p56
      %p58 = scmp.ne.s32.totalorder %s44, %s45
      %p59 = scmp.eq.s32.totalorder %s23, 1
      %p60 = por %p58, %p59
      %p62 = scmp.ne.s32.totalorder %s45, %s61
      %p63 = scmp.eq.s32.totalorder %s23, 0
      %p64 = por %p62, %p63
      %s65 = ssub.s32 %s24, %s36
      %s66 = ssub.s32 %s25, %s32
      %s67 = sor.u32 %s65, %s66
      %p68 = scmp.eq.s32.totalorder %s67, 0
      %s70 = sadd.s32 %s69, 1
      %s71 = scalar_select %p68, %s69, %s70
      %p74 = pneg %p68
      %p75 = scmp.eq.s32.totalorder %s17, 1
      %p76 = por %p74, %p75
      %p77 = scmp.ne.s32.totalorder %s69, %s72
      %p78 = scmp.eq.s32.totalorder %s17, 0
      %p79 = por %p77, %p78
      %p80 = scmp.ne.s32.totalorder %s69, %s72
      %p81 = scmp.eq.s32.totalorder %s22, 1
      %p82 = por %p80, %p81
      %p83 = scmp.ne.s32.totalorder %s72, %s73
      %p84 = scmp.eq.s32.totalorder %s22, 0
      %p85 = por %p83, %p84
      %p86 = scmp.ne.s32.totalorder %s72, %s73
      %p87 = scmp.eq.s32.totalorder %s23, 1
      %p88 = por %p86, %p87
      %p90 = scmp.ne.s32.totalorder %s73, %s89
      %p91 = scmp.eq.s32.totalorder %s23, 0
      %p92 = por %p90, %p91
      %s93 = ssub.s32 %s24, %s36
      %s94 = ssub.s32 %s25, %s32
      %s95 = sor.u32 %s93, %s94
      %p96 = scmp.eq.s32.totalorder %s95, 0
      %s98 = sadd.s32 %s97, 1
      %s99 = scalar_select %p96, %s97, %s98
      %p102 = pneg %p96
      %p103 = scmp.eq.s32.totalorder %s17, 1
      %p104 = por %p102, %p103
      %p105 = scmp.ne.s32.totalorder %s97, %s100
      %p106 = scmp.eq.s32.totalorder %s17, 0
      %p107 = por %p105, %p106
      %p108 = scmp.ne.s32.totalorder %s97, %s100
      %p109 = scmp.eq.s32.totalorder %s22, 1
      %p110 = por %p108, %p109
      %p111 = scmp.ne.s32.totalorder %s100, %s101
      %p112 = scmp.eq.s32.totalorder %s22, 0
      %p113 = por %p111, %p112
      %p114 = scmp.ne.s32.totalorder %s100, %s101
      %p115 = scmp.eq.s32.totalorder %s23, 1
      %p116 = por %p114, %p115
      %p118 = scmp.ne.s32.totalorder %s101, %s117
      %p119 = scmp.eq.s32.totalorder %s23, 0
      %p120 = por %p118, %p119
      %p121 = scmp.le.s32.totalorder 1, %s17
      %p122 = scmp.lt.s32.totalorder %s17, 3
      %p123 = pnand %p121, %p122
      %p124 = pneg %p123
      // Predicated region
      $region9: #{tpu_custom_call.1} parent=5 // pred_check
        _
      $region10: #{tpu_custom_call.1} parent=5 // pred_check_branch
        %126 = sbr.rel (%p123) target = $region12
      $region11: #{tpu_custom_call.1} parent=5 // pred_region
        %s127 = ssub.s32 %s17, 1
      $region12: #{tpu_custom_call.1} parent=5 // pred_fallthru
        _
      %p128 = scmp.lt.s32.totalorder %s17, 2
      // Predicated region
      $region13: #{tpu_custom_call.1} parent=5 // pred_check
        %p129 = pneg %p128
      $region14: #{tpu_custom_call.1} parent=5 // pred_check_branch
        %131 = sbr.rel (%p129) target = $region16
      $region15: #{tpu_custom_call.1} parent=5 // pred_region
        // Predicated region
        $region17: #{tpu_custom_call.1} parent=15 // pred_check
          %p132 = pneg %p51
        $region18: #{tpu_custom_call.1} parent=15 // pred_check_branch
          %134 = sbr.rel (%p132) target = $region20
        $region19: #{tpu_custom_call.1} parent=15 // pred_region
          %s135 = sand.u32 %s41, 1
          %s136 = scalar_lea.sflag [#allocation3], %s135
          %s137 = sand.u32 %s41, 1
          %s138 = smul.addr %s137, 8
          %s139 = scalar_lea.vmem [#allocation2], %s138
          %s141 = ssub.s32 128, 128
          %142 = vsyncadd %s136, %s141
          %s143 = smul.addr %s24, 4
          %s144 = sadd.s32 %s25, %s143
          %s145 = smul.addr %s144, 32
          %s146 = scalar_lea.hbm %s0, %s145
          %s147 = sshll.u32 %s139, 4
          %s148 = int_to_ptr.vmem [resolvable:$true] %s147
          %153 = dma.hbm_to_vmem [thread:$0]  %s146, 128, %s148, %s136, 32, 32, 2
        $region20: #{tpu_custom_call.1} parent=15 // pred_fallthru
          _
        // Predicated region
        $region21: #{tpu_custom_call.1} parent=15 // pred_check
          %p154 = pneg %p79
        $region22: #{tpu_custom_call.1} parent=15 // pred_check_branch
          %156 = sbr.rel (%p154) target = $region24
        $region23: #{tpu_custom_call.1} parent=15 // pred_region
          %s157 = sand.u32 %s69, 1
          %s158 = scalar_lea.sflag [#allocation6], %s157
          %s159 = sand.u32 %s69, 1
          %s160 = smul.addr %s159, 2
          %s161 = scalar_lea.vmem [#allocation5], %s160
          %s163 = ssub.s32 32, 32
          %164 = vsyncadd %s158, %s163
          %s165 = sadd.s32 %s25, %s24
          %s166 = smul.addr %s165, 32
          %s167 = scalar_lea.hbm %s1, %s166
          %s169 = sshll.u32 %s161, 4
          %s170 = int_to_ptr.vmem [resolvable:$true] %s169
          %172 = dma.hbm_to_vmem [thread:$0]  %s167, 32, %s170, %s158
        $region24: #{tpu_custom_call.1} parent=15 // pred_fallthru
          _
      $region16: #{tpu_custom_call.1} parent=5 // pred_fallthru
        _
      %p173 = scmp.le.s32.totalorder 1, %s17
      %p174 = scmp.lt.s32.totalorder %s17, 3
      %p175 = pnand %p173, %p174
      %p176 = pneg %p175
      // Predicated region
      $region25: #{tpu_custom_call.1} parent=5 // pred_check
        _
      $region26: #{tpu_custom_call.1} parent=5 // pred_check_branch
        %178 = sbr.rel (%p175) target = $region28
      $region27: #{tpu_custom_call.1} parent=5 // pred_region
        %s179 = ssub.s32 %s17, 1
        %s180 = sand.u32 %s44, 1
        %s181 = scalar_lea.sflag [#allocation3], %s180
        %s182 = sand.u32 %s44, 1
        %s183 = smul.addr %s182, 8
        %s184 = scalar_lea.vmem [#allocation2], %s183
        // Predicated region
        $region29: #{tpu_custom_call.1} parent=27 // pred_check
          %p185 = pneg %p57
        $region30: #{tpu_custom_call.1} parent=27 // pred_check_branch
          %187 = sbr.rel (%p185) target = $region32
        $region31: #{tpu_custom_call.1} parent=27 // pred_region
          %188 = dma.done %s181, 128
        $region32: #{tpu_custom_call.1} parent=27 // pred_fallthru
          _
        %s189 = sand.u32 %s72, 1
        %s190 = scalar_lea.sflag [#allocation6], %s189
        %s191 = sand.u32 %s72, 1
        %s192 = smul.addr %s191, 2
        %s193 = scalar_lea.vmem [#allocation5], %s192
        // Predicated region
        $region33: #{tpu_custom_call.1} parent=27 // pred_check
          %p194 = pneg %p85
        $region34: #{tpu_custom_call.1} parent=27 // pred_check_branch
          %196 = sbr.rel (%p194) target = $region36
        $region35: #{tpu_custom_call.1} parent=27 // pred_region
          %197 = dma.done %s190, 32
        $region36: #{tpu_custom_call.1} parent=27 // pred_fallthru
          _
        %s198 = sand.u32 %s44, 1
        %s199 = scalar_lea.sflag [#allocation3], %s198
        %s200 = sand.u32 %s44, 1
        %s201 = smul.addr %s200, 8
        %s202 = scalar_lea.vmem [#allocation2], %s201
        %p203 = pneg %p57
        %p204 = pneg %p54
        %s205 = sand.u32 %s72, 1
        %s206 = scalar_lea.sflag [#allocation6], %s205
        %s207 = sand.u32 %s72, 1
        %s208 = smul.addr %s207, 2
        %s209 = scalar_lea.vmem [#allocation5], %s208
        %p210 = pneg %p85
        %p211 = pneg %p82
        %p212 = pneg %p113
        %p213 = pneg %p110
        %s214 = sand.u32 %s100, 1
        %s215 = scalar_lea.sflag [#allocation4], %s214
        %s216 = sand.u32 %s100, 1
        %s217 = smul.addr %s216, 16
        %s218 = scalar_lea.vmem [#allocation7], %s217
        %v219 = vld [vmem:[%s193] sm:$0x3]
        %vm220 = vcmp.eq.s32.totalorder %v219, 85
        %v221 = vsel %vm220, 1, 0
        %vm222 = vcmp.eq.s32.totalorder %v219, 170
        %v223 = vsel %vm222, 2, %v221
        %vm224 = vcmp.eq.s32.totalorder %v219, 255
        %v225 = vsel %vm224, 3, %v223
        %v226 = vld [vmem:[%s184] sm:$0x3]
        %s227 = scalar_lea.vmem %s184, 2 [#allocation2]
        %v228 = vld [vmem:[%s227] sm:$0x3]
        %v229 = vmax.f32 %v226, %v228
        %s230 = scalar_lea.vmem %s184, 4 [#allocation2]
        %v231 = vld [vmem:[%s230] sm:$0x3]
        %v232 = vmax.f32 %v229, %v231
        %s233 = scalar_lea.vmem %s184, 6 [#allocation2]
        %v234 = vld [vmem:[%s233] sm:$0x3]
        %v235 = vmax.f32 %v232, %v234
        %v236 = vsub.f32 %v226, %v235
        %v237 = vmul.f32 %v236, 1.442695
        %v238 = vpow.pop %v237
        %v239 = vsub.f32 %v228, %v235
        %v240 = vmul.f32 %v239, 1.442695
        %v241 = vpow.pop %v240
        %v242 = vadd.f32 %v238, %v241
        %v243 = vsub.f32 %v231, %v235
        %v244 = vmul.f32 %v243, 1.442695
        %v245 = vpow.pop %v244
        %v246 = vadd.f32 %v242, %v245
        %v247 = vsub.f32 %v234, %v235
        %v248 = vmul.f32 %v247, 1.442695
        %v249 = vpow.pop %v248
        %v250 = vadd.f32 %v246, %v249
        %v251 = vrcp.pop %v250
        %v252 = vlog2.pop %v250
        %v253 = vmul.f32 %v252, 0.6931472
        %vm254 = vcmp.eq.s32.totalorder %v225, 0
        %v255 = vsel %vm254, %v226, 0.0
        %v256 = vsel %vm254, 1, 0
        %v257 = vcvt.s32.f32 %v256
        %v258 = vmul.f32 %v238, %v251
        %v259 = vmul.f32 %v258, %v257
        %vm260 = vcmask 1041408
        %v261 = vsel %vm260, %v259, 0.0
        %v262 = vrot.slane %v261, 4
        %v263 = vadd.f32 %v261, %v262
        %v264 = vrot.slane %v263, 2
        %v265 = vadd.f32 %v263, %v264
        %v266 = vrot.slane %v265, 1
        %v267 = vadd.f32 %v265, %v266
        %v268 = vsel %vm260, %v258, 0.0
        %v269 = vrot.slane %v268, 4
        %v270 = vadd.f32 %v268, %v269
        %v271 = vrot.slane %v270, 2
        %v272 = vadd.f32 %v270, %v271
        %v273 = vrot.slane %v272, 1
        %v274 = vadd.f32 %v272, %v273
        %v275 = vsel %vm260, %v257, 0.0
        %v276 = vrot.slane %v275, 4
        %v277 = vadd.f32 %v275, %v276
        %v278 = vrot.slane %v277, 2
        %v279 = vadd.f32 %v277, %v278
        %v280 = vrot.slane %v279, 1
        %v281 = vadd.f32 %v279, %v280
        %vm282 = vcmp.eq.s32.totalorder %v225, 1
        %v283 = vsel %vm282, %v228, %v255
        %v284 = vsel %vm282, 1, 0
        %v285 = vcvt.s32.f32 %v284
        %v286 = vmul.f32 %v241, %v251
        %v287 = vmul.f32 %v286, %v285
        %v288 = vsel %vm260, %v287, 0.0
        %v289 = vrot.slane %v288, 4
        %v290 = vadd.f32 %v288, %v289
        %v291 = vrot.slane %v290, 2
        %v292 = vadd.f32 %v290, %v291
        %v293 = vrot.slane %v292, 1
        %v294 = vadd.f32 %v292, %v293
        %v295 = vsel %vm260, %v286, 0.0
        %v296 = vrot.slane %v295, 4
        %v297 = vadd.f32 %v295, %v296
        %v298 = vrot.slane %v297, 2
        %v299 = vadd.f32 %v297, %v298
        %v300 = vrot.slane %v299, 1
        %v301 = vadd.f32 %v299, %v300
        %v302 = vsel %vm260, %v285, 0.0
        %v303 = vrot.slane %v302, 4
        %v304 = vadd.f32 %v302, %v303
        %v305 = vrot.slane %v304, 2
        %v306 = vadd.f32 %v304, %v305
        %v307 = vrot.slane %v306, 1
        %v308 = vadd.f32 %v306, %v307
        %vm309 = vcmp.eq.s32.totalorder %v225, 2
        %v310 = vsel %vm309, %v231, %v283
        %v311 = vsel %vm309, 1, 0
        %v312 = vcvt.s32.f32 %v311
        %v313 = vmul.f32 %v245, %v251
        %v314 = vmul.f32 %v313, %v312
        %v315 = vsel %vm260, %v314, 0.0
        %v316 = vrot.slane %v315, 4
        %v317 = vadd.f32 %v315, %v316
        %v318 = vrot.slane %v317, 2
        %v319 = vadd.f32 %v317, %v318
        %v320 = vrot.slane %v319, 1
        %v321 = vadd.f32 %v319, %v320
        %v322 = vsel %vm260, %v313, 0.0
        %v323 = vrot.slane %v322, 4
        %v324 = vadd.f32 %v322, %v323
        %v325 = vrot.slane %v324, 2
        %v326 = vadd.f32 %v324, %v325
        %v327 = vrot.slane %v326, 1
        %v328 = vadd.f32 %v326, %v327
        %v329 = vsel %vm260, %v312, 0.0
        %v330 = vrot.slane %v329, 4
        %v331 = vadd.f32 %v329, %v330
        %v332 = vrot.slane %v331, 2
        %v333 = vadd.f32 %v331, %v332
        %v334 = vrot.slane %v333, 1
        %v335 = vadd.f32 %v333, %v334
        %vm336 = vcmp.eq.s32.totalorder %v225, 3
        %v337 = vsel %vm336, %v234, %v310
        %v338 = vsel %vm336, 1, 0
        %v339 = vcvt.s32.f32 %v338
        %v340 = vmul.f32 %v249, %v251
        %v341 = vmul.f32 %v340, %v339
        %v342 = vsel %vm260, %v341, 0.0
        %v343 = vrot.slane %v342, 4
        %v344 = vadd.f32 %v342, %v343
        %v345 = vrot.slane %v344, 2
        %v346 = vadd.f32 %v344, %v345
        %v347 = vrot.slane %v346, 1
        %v348 = vadd.f32 %v346, %v347
        %v349 = vsel %vm260, %v340, 0.0
        %v350 = vrot.slane %v349, 4
        %v351 = vadd.f32 %v349, %v350
        %v352 = vrot.slane %v351, 2
        %v353 = vadd.f32 %v351, %v352
        %v354 = vrot.slane %v353, 1
        %v355 = vadd.f32 %v353, %v354
        %v356 = vsel %vm260, %v339, 0.0
        %v357 = vrot.slane %v356, 4
        %v358 = vadd.f32 %v356, %v357
        %v359 = vrot.slane %v358, 2
        %v360 = vadd.f32 %v358, %v359
        %v361 = vrot.slane %v360, 1
        %v362 = vadd.f32 %v360, %v361
        %v363 = vadd.f32 %v253, %v235
        %v364 = vsub.f32 %v363, %v337
        %v365 = vsel %vm260, %v364, 0.0
        %v366 = vrot.slane %v365, 4
        %v367 = vadd.f32 %v365, %v366
        %v368 = vrot.slane %v367, 2
        %v369 = vadd.f32 %v367, %v368
        %v370 = vrot.slane %v369, 1
        %v371 = vadd.f32 %v369, %v370
        %vm372 = vcmask 1040384
        %v373 = vsel %vm372, %v267, %v294
        %v374 = vsel %vm260, %v373, %v321
        %vm375 = vcmask 1042432
        %v376 = vsel %vm375, %v374, %v348
        %vm377 = vcmask 1043456
        %v378 = vsel %vm377, %v376, %v274
        %vm379 = vcmask 1044480
        %v380 = vsel %vm379, %v378, %v301
        %vm381 = vcmask 1045504
        %v382 = vsel %vm381, %v380, %v328
        %vm383 = vcmask 1046528
        %v384 = vsel %vm383, %v382, %v355
        %v385 = vsel %vm372, %v281, %v308
        %v386 = vsel %vm260, %v385, %v335
        %v387 = vsel %vm375, %v386, %v362
        %v388 = vsel %vm377, %v387, %v371
        %v389 = vsel %vm379, %v388, 0.0
        %390 = vst [vmem:[%s218] sm:$0xff] %v384
        %391 = vst [vmem:[%s218 + $0x8] sm:$0xff] %v389
        %s392 = sand.u32 %s100, 1
        %s393 = scalar_lea.sflag [#allocation4], %s392
        %s394 = sand.u32 %s100, 1
        %s395 = smul.addr %s394, 16
        %s396 = scalar_lea.vmem [#allocation7], %s395
        // Predicated region
        $region37: #{tpu_custom_call.1} parent=27 // pred_check
          %p397 = pneg %p110
        $region38: #{tpu_custom_call.1} parent=27 // pred_check_branch
          %399 = sbr.rel (%p397) target = $region40
        $region39: #{tpu_custom_call.1} parent=27 // pred_region
          %s401 = ssub.s32 256, 256
          %402 = vsyncadd %s393, %s401
          %s403 = smul.addr %s27, 2
          %s404 = smul.addr %s26, 2
          %s405 = sadd.s32 %s403, %s404
          %s406 = smul.addr %s405, 128
          %s407 = scalar_lea.hbm %s2, %s406
          %s408 = sshll.u32 %s396, 4
          %s409 = int_to_ptr.vmem [resolvable:$true] %s408
          %414 = dma.vmem_to_hbm [thread:$0]  %s409, 256, %s407, %s393, 128, 128, 8
        $region40: #{tpu_custom_call.1} parent=27 // pred_fallthru
          _
      $region28: #{tpu_custom_call.1} parent=5 // pred_fallthru
        _
      %p415 = scmp.le.s32.totalorder 2, %s17
      // Predicated region
      $region41: #{tpu_custom_call.1} parent=5 // pred_check
        %p416 = pneg %p415
      $region42: #{tpu_custom_call.1} parent=5 // pred_check_branch
        %418 = sbr.rel (%p416) target = $region44
      $region43: #{tpu_custom_call.1} parent=5 // pred_region
        %s419 = ssub.s32 %s17, 2
        // Predicated region
        $region45: #{tpu_custom_call.1} parent=43 // pred_check
          %p420 = pneg %p116
        $region46: #{tpu_custom_call.1} parent=43 // pred_check_branch
          %422 = sbr.rel (%p420) target = $region48
        $region47: #{tpu_custom_call.1} parent=43 // pred_region
          %s423 = sand.u32 %s101, 1
          %s424 = scalar_lea.sflag [#allocation4], %s423
          %s425 = sand.u32 %s101, 1
          %s426 = smul.addr %s425, 16
          %s427 = scalar_lea.vmem [#allocation7], %s426
          %428 = dma.done %s424, 256
        $region48: #{tpu_custom_call.1} parent=43 // pred_fallthru
          _
      $region44: #{tpu_custom_call.1} parent=5 // pred_fallthru
        _
    $region6: #{tpu_custom_call.1} parent=1 // loop_footer
      %s21 = sadd.s32 1, %s17
    $region7: #{tpu_custom_call.1} parent=1 // loop_footer_branch
      %16 = sbr.rel target = $region3
    $region8: #{tpu_custom_call.1} parent=1 // loop_exit
      _
    %429 = vsyncpa [#allocation3], 1
    %s430 = scalar_lea.sflag [#allocation3], 1
    %431 = vsyncpa %s430, 1
    %432 = vsyncpa [#allocation6], 1
    %s433 = scalar_lea.sflag [#allocation6], 1
    %434 = vsyncpa %s433, 1
    %435 = vsyncpa [#allocation4], 1
    %s436 = scalar_lea.sflag [#allocation4], 1
    %437 = vsyncpa %s436, 1

</llo_original>
